<compile_context>
chip_gen: v5e
topology: v5e:2x2
jax: 0.10.0
libtpu: 0.0.40
codegen_flags: <defaults>
</compile_context>

<pallas_src>
import jax
import jax.numpy as jnp
from jax.experimental import pallas as pl
from jax.experimental.pallas import tpu as pltpu


def _round_up(v, m):
    return ((v + m - 1) // m) * m


def _mlp_kernel(x_ref, w0_ref, b0_ref, w1_ref, b1_ref, w2_ref, b2_ref, o_ref):
    # x_ref : [tile_n, input_size]      f32   (particles on sublanes)
    # w0    : [input_size, hidden_pad]  bf16    b0: [1, hidden_pad]  bf16
    # w1    : [hidden_pad, hidden_pad]  bf16    b1: [1, hidden_pad]  bf16
    # w2    : [hidden_pad, output_size] bf16    b2: [1, output_size] f32
    # o_ref : [tile_n, output_size]     f32
    cdt = w0_ref.dtype  # bf16 compute dtype for MXU inputs / epilogues

    # In-kernel cast (VPU) instead of a separate XLA pre-pass over all of x.
    x = x_ref[...].astype(cdt)

    # Layer 0: bf16 MXU matmul, f32 accumulation, bf16 bias + ReLU epilogue.
    h = jnp.dot(x, w0_ref[...], preferred_element_type=jnp.float32)
    h = jnp.maximum(h.astype(cdt) + b0_ref[...], 0)

    # Layer 1
    h = jnp.dot(h, w1_ref[...], preferred_element_type=jnp.float32)
    h = jnp.maximum(h.astype(cdt) + b1_ref[...], 0)

    # Layer 2 (no activation): f32 bias add, f32 output written in [n, out]
    # layout so no post-kernel transpose/slice is needed.
    y = jnp.dot(h, w2_ref[...], preferred_element_type=jnp.float32) + b2_ref[...]
    o_ref[...] = y.astype(o_ref.dtype)


def prepare_params(params, lane=128):
    """Pad the hidden dim to a lane-dense multiple of 128 and cast for the kernel.

    Input (math layout): w0 [in, hid], b0 [hid], w1 [hid, hid], b1 [hid],
    w2 [hid, out], b2 [out].
    Returns kernel-ready params:
      w0p [in, hp] bf16, b0p [1, hp] bf16, w1p [hp, hp] bf16, b1p [1, hp] bf16,
      w2p [hp, out] bf16, b2p [1, out] f32.
    Zero padding is exact: padded hidden units get bias 0 -> ReLU(0) = 0, and
    their (zero) rows of w1 / w2 contribute nothing downstream.
    """
    w0, b0, w1, b1, w2, b2 = params
    hidden = w0.shape[1]
    output_size = w2.shape[1]
    hp = _round_up(hidden, lane)
    ph = hp - hidden

    w0p = jnp.pad(w0, ((0, 0), (0, ph))).astype(jnp.bfloat16)
    b0p = jnp.pad(b0, ((0, ph),)).reshape(1, hp).astype(jnp.bfloat16)
    w1p = jnp.pad(w1, ((0, ph), (0, ph))).astype(jnp.bfloat16)
    b1p = jnp.pad(b1, ((0, ph),)).reshape(1, hp).astype(jnp.bfloat16)
    w2p = jnp.pad(w2, ((0, ph), (0, 0))).astype(jnp.bfloat16)   # [hp, out]
    b2p = b2.reshape(1, output_size).astype(jnp.float32)
    return (w0p, b0p, w1p, b1p, w2p, b2p)


def _choose_tile(n, requested):
    """Pick the particle-tile size.

    n <= requested: one exact block (block dims equal full array dims, so the
    (8,128) divisibility rule is satisfied for any n).  Otherwise use a
    256-row multiple, capped so the grid has at least 2 steps (v7x has 2 TCs).
    """
    if n <= requested:
        return n
    requested = max(256, (int(requested) // 256) * 256)
    half = _round_up(-(-n // 2), 256)  # ceil(n/2) rounded up to 256
    return min(requested, half)


def particle_predictor(x, params, *, tile_n=2048):
    """x: [n_particles, input_size] f32 -> [n_particles, output_size] f32.

    `params` must come from prepare_params().  tile_n is the max particle rows
    per grid step; sweep 2048-8192 on real workloads (vmem_limit_bytes below is
    sized from the tile and stays under v7x's 64 MiB physical VMEM).
    """
    w0, b0, w1, b1, w2, b2 = params
    n, input_size = x.shape
    hidden_pad = w0.shape[1]
    output_size = w2.shape[1]

    tn = _choose_tile(n, tile_n)
    grid = (pl.cdiv(n, tn),)

    # Weights/biases are tiny; constant index maps keep them VMEM-resident
    # across grid steps (no per-step re-DMA of the 6 small buffers).
    full = lambda shape: pl.BlockSpec(shape, lambda i: (0,) * len(shape))

    flops = 2 * n * (input_size * hidden_pad
                     + hidden_pad * hidden_pad
                     + hidden_pad * output_size)
    param_bytes = (2 * (input_size * hidden_pad + hidden_pad * hidden_pad
                        + hidden_pad * output_size + 2 * hidden_pad)
                   + 4 * output_size)
    bytes_accessed = 4 * n * (input_size + output_size) + param_bytes

    # Double-buffered x/out streams + f32 hidden temporaries, with headroom.
    vmem_est = (2 * tn * (input_size + output_size) * 4
                + 4 * tn * hidden_pad * 4
                + 2 * param_bytes + (1 << 20))
    vmem_limit = int(min(max(2 * vmem_est, 32 * 1024 * 1024), 64 * 1024 * 1024))

    return pl.pallas_call(
        _mlp_kernel,
        out_shape=jax.ShapeDtypeStruct((n, output_size), jnp.float32),
        grid_spec=pltpu.PrefetchScalarGridSpec(
            num_scalar_prefetch=0,
            grid=grid,
            in_specs=[
                pl.BlockSpec((tn, input_size), lambda i: (i, 0)),   # x stream
                full((input_size, hidden_pad)),                      # w0
                full((1, hidden_pad)),                               # b0
                full((hidden_pad, hidden_pad)),                      # w1
                full((1, hidden_pad)),                               # b1
                full((hidden_pad, output_size)),                     # w2
                full((1, output_size)),                              # b2
            ],
            out_specs=pl.BlockSpec((tn, output_size), lambda i: (i, 0)),
        ),
        compiler_params=pltpu.CompilerParams(
            # Particle tiles are embarrassingly parallel; with >= 2 grid steps
            # both v7x TensorCores get work.
            dimension_semantics=("parallel",),
            vmem_limit_bytes=vmem_limit,
        ),
        cost_estimate=pl.CostEstimate(
            flops=flops, transcendentals=0, bytes_accessed=bytes_accessed),
    )(x, w0, b0, w1, b1, w2, b2)


def init_params(key, input_size, hidden_size, output_size, dtype=jnp.float32):
    """Deterministic init mimicking nn.Linear default U[-1/sqrt(fan_in), 1/sqrt(fan_in)]."""
    ks = jax.random.split(key, 6)

    def linear(kw, kb, fan_in, fan_out):
        bound = 1.0 / jnp.sqrt(jnp.asarray(fan_in, dtype))
        w = jax.random.uniform(kw, (fan_in, fan_out), dtype, -bound, bound)
        b = jax.random.uniform(kb, (fan_out,), dtype, -bound, bound)
        return w, b

    w0, b0 = linear(ks[0], ks[1], input_size, hidden_size)
    w1, b1 = linear(ks[2], ks[3], hidden_size, hidden_size)
    w2, b2 = linear(ks[4], ks[5], hidden_size, output_size)
    return (w0, b0, w1, b1, w2, b2)


def reference(x, raw_params):
    w0, b0, w1, b1, w2, b2 = raw_params
    h = jnp.maximum(x @ w0 + b0, 0.0)
    h = jnp.maximum(h @ w1 + b1, 0.0)
    return h @ w2 + b2


if __name__ == "__main__":
    key = jax.random.PRNGKey(0)
    k_x, k_p = jax.random.split(key)

    n_particles, input_size, hidden_size, output_size = 16, 16, 32, 8
    x = jax.random.normal(k_x, (n_particles, input_size), jnp.float32)

    raw_params = init_params(k_p, input_size, hidden_size, output_size)
    params = prepare_params(raw_params)

    y = particle_predictor(x, params)
    y = jax.block_until_ready(y)

    y_ref = reference(x, raw_params)  # full-f32 reference
    assert y.shape == (n_particles, output_size)
    # Kernel uses bf16 inputs/weights/epilogues with f32 MXU accumulation ->
    # allow bf16-level error vs the f32 reference.
    assert jnp.allclose(y, y_ref, atol=4e-2, rtol=4e-2), (
        f"mismatch vs reference, max abs err={jnp.max(jnp.abs(y - y_ref))}"
    )

    print("KERNEL_OK")
</pallas_src>

<mosaic_0001>
module attributes {stable_mosaic.version = 11 : i64} {
  func.func @_mlp_kernel(%arg0: i32, %arg1: memref<16x16xf32, #tpu.memory_space<vmem>>, %arg2: memref<16x128xbf16, #tpu.memory_space<vmem>>, %arg3: memref<1x128xbf16, #tpu.memory_space<vmem>>, %arg4: memref<128x128xbf16, #tpu.memory_space<vmem>>, %arg5: memref<1x128xbf16, #tpu.memory_space<vmem>>, %arg6: memref<128x8xbf16, #tpu.memory_space<vmem>>, %arg7: memref<1x8xf32, #tpu.memory_space<vmem>>, %arg8: memref<16x8xf32, #tpu.memory_space<vmem>>) attributes {dimension_semantics = [#tpu.dimension_semantics<parallel>], iteration_bounds = array<i64: 1>, scalar_prefetch = 0 : i64, scratch_operands = 0 : i64, tpu.core_type = #tpu.core_type<tc>, window_params = [{transform_indices = @transform_0, window_bounds = array<i64: 16, 16>}, {pipeline_mode = #tpu.pipeline_mode<synchronous>, transform_indices = @transform_1, window_bounds = array<i64: 16, 128>}, {pipeline_mode = #tpu.pipeline_mode<synchronous>, transform_indices = @transform_2, window_bounds = array<i64: 1, 128>}, {pipeline_mode = #tpu.pipeline_mode<synchronous>, transform_indices = @transform_3, window_bounds = array<i64: 128, 128>}, {pipeline_mode = #tpu.pipeline_mode<synchronous>, transform_indices = @transform_4, window_bounds = array<i64: 1, 128>}, {pipeline_mode = #tpu.pipeline_mode<synchronous>, transform_indices = @transform_5, window_bounds = array<i64: 128, 8>}, {pipeline_mode = #tpu.pipeline_mode<synchronous>, transform_indices = @transform_6, window_bounds = array<i64: 1, 8>}, {transform_indices = @transform_7, window_bounds = array<i64: 16, 8>}]} {
    %c0 = arith.constant 0 : index
    %c0_0 = arith.constant 0 : index
    %0 = vector.load %arg1[%c0, %c0_0] : memref<16x16xf32, #tpu.memory_space<vmem>>, vector<16x16xf32>
    %1 = arith.truncf %0 : vector<16x16xf32> to vector<16x16xbf16>
    %c0_1 = arith.constant 0 : index
    %c0_2 = arith.constant 0 : index
    %2 = vector.load %arg2[%c0_1, %c0_2] : memref<16x128xbf16, #tpu.memory_space<vmem>>, vector<16x128xbf16>
    %cst = arith.constant dense<0.000000e+00> : vector<16x128xf32>
    %3 = tpu.matmul %1, %2, %cst {dimension_numbers = #tpu.dot_dimension_numbers<[1], [0], [0], [1], [0, 0, 1, 1], [], []>} : vector<16x16xbf16>, vector<16x128xbf16>, vector<16x128xf32> -> vector<16x128xf32>
    %4 = arith.truncf %3 : vector<16x128xf32> to vector<16x128xbf16>
    %c0_3 = arith.constant 0 : index
    %c0_4 = arith.constant 0 : index
    %5 = vector.load %arg3[%c0_3, %c0_4] : memref<1x128xbf16, #tpu.memory_space<vmem>>, vector<1x128xbf16>
    %6 = vector.broadcast %5 : vector<1x128xbf16> to vector<16x128xbf16>
    %7 = arith.addf %4, %6 : vector<16x128xbf16>
    %cst_5 = arith.constant 0.000000e+00 : bf16
    %8 = vector.broadcast %cst_5 : bf16 to vector<16x128xbf16>
    %9 = arith.maximumf %7, %8 : vector<16x128xbf16>
    %c0_6 = arith.constant 0 : index
    %c0_7 = arith.constant 0 : index
    %10 = vector.load %arg4[%c0_6, %c0_7] : memref<128x128xbf16, #tpu.memory_space<vmem>>, vector<128x128xbf16>
    %cst_8 = arith.constant dense<0.000000e+00> : vector<16x128xf32>
    %11 = tpu.matmul %9, %10, %cst_8 {dimension_numbers = #tpu.dot_dimension_numbers<[1], [0], [0], [1], [0, 0, 1, 1], [], []>} : vector<16x128xbf16>, vector<128x128xbf16>, vector<16x128xf32> -> vector<16x128xf32>
    %12 = arith.truncf %11 : vector<16x128xf32> to vector<16x128xbf16>
    %c0_9 = arith.constant 0 : index
    %c0_10 = arith.constant 0 : index
    %13 = vector.load %arg5[%c0_9, %c0_10] : memref<1x128xbf16, #tpu.memory_space<vmem>>, vector<1x128xbf16>
    %14 = vector.broadcast %13 : vector<1x128xbf16> to vector<16x128xbf16>
    %15 = arith.addf %12, %14 : vector<16x128xbf16>
    %cst_11 = arith.constant 0.000000e+00 : bf16
    %16 = vector.broadcast %cst_11 : bf16 to vector<16x128xbf16>
    %17 = arith.maximumf %15, %16 : vector<16x128xbf16>
    %c0_12 = arith.constant 0 : index
    %c0_13 = arith.constant 0 : index
    %18 = vector.load %arg6[%c0_12, %c0_13] : memref<128x8xbf16, #tpu.memory_space<vmem>>, vector<128x8xbf16>
    %cst_14 = arith.constant dense<0.000000e+00> : vector<16x8xf32>
    %19 = tpu.matmul %17, %18, %cst_14 {dimension_numbers = #tpu.dot_dimension_numbers<[1], [0], [0], [1], [0, 0, 1, 1], [], []>} : vector<16x128xbf16>, vector<128x8xbf16>, vector<16x8xf32> -> vector<16x8xf32>
    %c0_15 = arith.constant 0 : index
    %c0_16 = arith.constant 0 : index
    %20 = vector.load %arg7[%c0_15, %c0_16] : memref<1x8xf32, #tpu.memory_space<vmem>>, vector<1x8xf32>
    %21 = vector.broadcast %20 : vector<1x8xf32> to vector<16x8xf32>
    %22 = arith.addf %19, %21 : vector<16x8xf32>
    %c0_17 = arith.constant 0 : index
    %c0_18 = arith.constant 0 : index
    %23 = vector.load %arg8[%c0_17, %c0_18] : memref<16x8xf32, #tpu.memory_space<vmem>>, vector<16x8xf32>
    tpu.vector_store %arg8[%c0_17, %c0_18], %22 {strides = array<i32>} : memref<16x8xf32, #tpu.memory_space<vmem>>, vector<16x8xf32>,
    return
  }
  func.func @transform_0(%arg0: i32) -> (i32, i32) {
    %c0_i32 = arith.constant 0 : i32
    %c0_i32_0 = arith.constant 0 : i32
    return %arg0, %c0_i32 : i32, i32
  }
  func.func @transform_1(%arg0: i32) -> (i32, i32) {
    %c0_i32 = arith.constant 0 : i32
    %c0_i32_0 = arith.constant 0 : i32
    %c0_i32_1 = arith.constant 0 : i32
    return %c0_i32, %c0_i32_0 : i32, i32
  }
  func.func @transform_2(%arg0: i32) -> (i32, i32) {
    %c0_i32 = arith.constant 0 : i32
    %c0_i32_0 = arith.constant 0 : i32
    %c0_i32_1 = arith.constant 0 : i32
    return %c0_i32, %c0_i32_0 : i32, i32
  }
  func.func @transform_3(%arg0: i32) -> (i32, i32) {
    %c0_i32 = arith.constant 0 : i32
    %c0_i32_0 = arith.constant 0 : i32
    %c0_i32_1 = arith.constant 0 : i32
    return %c0_i32, %c0_i32_0 : i32, i32
  }
  func.func @transform_4(%arg0: i32) -> (i32, i32) {
    %c0_i32 = arith.constant 0 : i32
    %c0_i32_0 = arith.constant 0 : i32
    %c0_i32_1 = arith.constant 0 : i32
    return %c0_i32, %c0_i32_0 : i32, i32
  }
  func.func @transform_5(%arg0: i32) -> (i32, i32) {
    %c0_i32 = arith.constant 0 : i32
    %c0_i32_0 = arith.constant 0 : i32
    %c0_i32_1 = arith.constant 0 : i32
    return %c0_i32, %c0_i32_0 : i32, i32
  }
  func.func @transform_6(%arg0: i32) -> (i32, i32) {
    %c0_i32 = arith.constant 0 : i32
    %c0_i32_0 = arith.constant 0 : i32
    %c0_i32_1 = arith.constant 0 : i32
    return %c0_i32, %c0_i32_0 : i32, i32
  }
  func.func @transform_7(%arg0: i32) -> (i32, i32) {
    %c0_i32 = arith.constant 0 : i32
    %c0_i32_0 = arith.constant 0 : i32
    return %arg0, %c0_i32 : i32, i32
  }
}

</mosaic_0001>

<llo_original>
// kernel: tpu_custom_call.1
$region0: #{tpu_custom_call.1}
  #allocation0 [shape = 'u32[]', space=smem, size = 0x4, offset = 0x4, fixed_abs, tag = 'smem constant byte address 0x4 - core index']
  #allocation1 [shape = 'u32[72,128]{1,0:T(1,128)}', space=vmem, size = 0x9000, scoped, tag = 'internal scratch']
  %s0 = inlined_call_operand.hbm [shape: f32[16,16], index: 0, kind: input, shape index: {}]
  %s1 = inlined_call_operand.hbm [shape: bf16[16,128], index: 1, kind: input, shape index: {}]
  %s2 = inlined_call_operand.vmem [shape: bf16[1,128], index: 2, kind: input, shape index: {}]
  %s3 = inlined_call_operand.vmem [shape: bf16[128,128], index: 3, kind: input, shape index: {}]
  %s4 = inlined_call_operand.vmem [shape: bf16[1,128], index: 4, kind: input, shape index: {}]
  %s5 = inlined_call_operand.vmem [shape: bf16[128,8], index: 5, kind: input, shape index: {}]
  %s6 = inlined_call_operand.vmem [shape: f32[1,8], index: 6, kind: input, shape index: {}]
  %s7 = inlined_call_operand.vmem [shape: f32[16,8], index: 7, kind: output, shape index: {}]
  %s8 = sld [smem:[#allocation0]]
  $region46: #{tpu_custom_call.1} parent=0
    _
  %s10 = ssub.s32 1, %s8
  %s11 = scalar_select 0, %s10, %s8
  $region1: #{tpu_custom_call.1} parent=0
    #allocation2 [shape = 'u8[8192]{0}', space=vmem, size = 0x2000, scoped, tag = 'input window, operand 0, single buffered']
    #allocation3 [shape = 's32[1]{0}', space=sflag, size = 0x4, scoped, tag = 'scoped memory for tpu_custom_call.1']
    #allocation4 [shape = 'u8[4096]{0}', space=vmem, size = 0x1000, scoped, tag = 'input window, operand 1, single buffered']
    #allocation5 [shape = 's32[1]{0}', space=sflag, size = 0x4, scoped, tag = 'scoped memory for tpu_custom_call.1']
    %12 = vsyncpa [#allocation3], 0
    %13 = vsyncpa [#allocation5], 0
    // Predicated region
    $region2: #{tpu_custom_call.1} parent=1 // pred_check
      _
    $region3: #{tpu_custom_call.1} parent=1 // pred_check_branch
      %15 = sbr.rel (0) target = $region5
    $region4: #{tpu_custom_call.1} parent=1 // pred_region
      %17 = vsyncadd [#allocation3], 0
      %s18 = sshll.u32 %s0, 4
      %s19 = int_to_ptr.hbm [resolvable:$true] %s18
      %s20 = sshll.u32 [#allocation2], 4
      %s21 = int_to_ptr.vmem [resolvable:$true] %s20
      %26 = dma.hbm_to_vmem [thread:$0]  %s19, 256, %s21, [#allocation3], 128, 128, 8
    $region5: #{tpu_custom_call.1} parent=1 // pred_fallthru
      _
    // Predicated region
    $region6: #{tpu_custom_call.1} parent=1 // pred_check
      _
    $region7: #{tpu_custom_call.1} parent=1 // pred_check_branch
      %28 = sbr.rel (0) target = $region9
    $region8: #{tpu_custom_call.1} parent=1 // pred_region
      %30 = vsyncadd [#allocation5], 0
      %s31 = sshll.u32 %s1, 4
      %s32 = int_to_ptr.hbm [resolvable:$true] %s31
      %s33 = sshll.u32 [#allocation4], 4
      %s34 = int_to_ptr.vmem [resolvable:$true] %s33
      %39 = dma.hbm_to_vmem [thread:$0]  %s32, 128, %s34, [#allocation5], 64, 64, 4
    $region9: #{tpu_custom_call.1} parent=1 // pred_fallthru
      _
    // Predicated region
    $region10: #{tpu_custom_call.1} parent=1 // pred_check
      _
    $region11: #{tpu_custom_call.1} parent=1 // pred_check_branch
      %41 = sbr.rel (0) target = $region13
    $region12: #{tpu_custom_call.1} parent=1 // pred_region
      _
    $region13: #{tpu_custom_call.1} parent=1 // pred_fallthru
      _
    // Predicated region
    $region14: #{tpu_custom_call.1} parent=1 // pred_check
      _
    $region15: #{tpu_custom_call.1} parent=1 // pred_check_branch
      %43 = sbr.rel (0) target = $region17
    $region16: #{tpu_custom_call.1} parent=1 // pred_region
      _
    $region17: #{tpu_custom_call.1} parent=1 // pred_fallthru
      _
    // Predicated region
    $region18: #{tpu_custom_call.1} parent=1 // pred_check
      _
    $region19: #{tpu_custom_call.1} parent=1 // pred_check_branch
      %45 = sbr.rel (0) target = $region21
    $region20: #{tpu_custom_call.1} parent=1 // pred_region
      _
    $region21: #{tpu_custom_call.1} parent=1 // pred_fallthru
      _
    // Predicated region
    $region22: #{tpu_custom_call.1} parent=1 // pred_check
      _
    $region23: #{tpu_custom_call.1} parent=1 // pred_check_branch
      %47 = sbr.rel (0) target = $region25
    $region24: #{tpu_custom_call.1} parent=1 // pred_region
      _
    $region25: #{tpu_custom_call.1} parent=1 // pred_fallthru
      _
    // Predicated region
    $region26: #{tpu_custom_call.1} parent=1 // pred_check
      _
    $region27: #{tpu_custom_call.1} parent=1 // pred_check_branch
      %49 = sbr.rel (0) target = $region29
    $region28: #{tpu_custom_call.1} parent=1 // pred_region
      _
    $region29: #{tpu_custom_call.1} parent=1 // pred_fallthru
      _
    // Predicated region
    $region30: #{tpu_custom_call.1} parent=1 // pred_check
      _
    $region31: #{tpu_custom_call.1} parent=1 // pred_check_branch
      %51 = sbr.rel (0) target = $region33
    $region32: #{tpu_custom_call.1} parent=1 // pred_region
      %53 = dma.done [#allocation3], 256
    $region33: #{tpu_custom_call.1} parent=1 // pred_fallthru
      _
    // Predicated region
    $region34: #{tpu_custom_call.1} parent=1 // pred_check
      _
    $region35: #{tpu_custom_call.1} parent=1 // pred_check_branch
      %55 = sbr.rel (0) target = $region37
    $region36: #{tpu_custom_call.1} parent=1 // pred_region
      %57 = dma.done [#allocation5], 128
    $region37: #{tpu_custom_call.1} parent=1 // pred_fallthru
      _
    %v59 = vld [vmem:[#allocation2] sm:$0xff]
    %v60 = vld [vmem:[#allocation2 + $0x8] sm:$0xff]
    %v61 = vpack.c.bf16 %v60, %v59
    %v62 = vld [vmem:[#allocation4] sm:$0xf]
    %v63 = vld [vmem:[#allocation4 + $0x4] sm:$0xf]
    %v66 = vunpack.c.l.b16 %v62
    %v67 = vunpack.c.l.b16 %v63
    %v68 = vpack.c.b16 %v67, %v66
    %vm70 = vcmask 130048
    %v72 = vsel %vm70, %v61, 0
    %74 = vmatpush.bf16.msra.mxu0 0
    %75 = vmatpush.bf16.msra.mxu0 0
    %76 = vmatpush.bf16.msra.mxu0 0
    %77 = vmatpush.bf16.msra.mxu0 0
    %78 = vmatpush.bf16.msra.mxu0 0
    %79 = vmatpush.bf16.msra.mxu0 0
    %80 = vmatpush.bf16.msra.mxu0 0
    %81 = vmatpush.bf16.msra.mxu0 %v68
    %82 = vmatmul.bf16.gmra.mxu0 %v72
    %v83 = vpop.f32.mrf.mxu0
    %v84 = vadd.f32 0.0, %v83
    %v85 = vpop.f32.mrf.mxu0
    %v86 = vadd.f32 0.0, %v85
    %87 = vdwg.mxu0
    %v88 = vpack.c.bf16 %v84, %v84
    %v89 = vpack.c.bf16 %v86, %v86
    %v90 = vld [vmem:[%s2] sm:$0x1]
    %v92 = vpack.i.b16 %v90, %v90
    %v94 = vperm.slane %v92, 0
    %v95 = vunpack.c.l.bf16 %v88
    %v96 = vunpack.c.l.bf16 %v89
    %v97 = vunpack.c.l.bf16 %v94
    %v98 = vadd.f32 %v95, %v97
    %v99 = vadd.f32 %v96, %v97
    %v100 = vpack.c.bf16 %v98, %v98
    %v101 = vpack.c.bf16 %v99, %v99
    %v102 = vunpack.c.l.bf16 %v100
    %v103 = vunpack.c.l.bf16 %v101
    %v104 = vmax.f32 %v102, 0.0
    %v105 = vmax.f32 %v103, 0.0
    %v106 = vpack.c.bf16 %v105, %v104
    %v107 = vld [vmem:[%s3] sm:$0xf]
    %v108 = vld [vmem:[%s3 + $0x4] sm:$0xf]
    %v109 = vld [vmem:[%s3 + $0x8] sm:$0xf]
    %v110 = vld [vmem:[%s3 + $0xc] sm:$0xf]
    %v111 = vld [vmem:[%s3 + $0x10] sm:$0xf]
    %v112 = vld [vmem:[%s3 + $0x14] sm:$0xf]
    %v113 = vld [vmem:[%s3 + $0x18] sm:$0xf]
    %v114 = vld [vmem:[%s3 + $0x1c] sm:$0xf]
    %v115 = vld [vmem:[%s3 + $0x20] sm:$0xf]
    %v116 = vld [vmem:[%s3 + $0x24] sm:$0xf]
    %v117 = vld [vmem:[%s3 + $0x28] sm:$0xf]
    %v118 = vld [vmem:[%s3 + $0x2c] sm:$0xf]
    %v119 = vld [vmem:[%s3 + $0x30] sm:$0xf]
    %v120 = vld [vmem:[%s3 + $0x34] sm:$0xf]
    %v121 = vld [vmem:[%s3 + $0x38] sm:$0xf]
    %v122 = vld [vmem:[%s3 + $0x3c] sm:$0xf]
    %v139 = vunpack.c.l.b16 %v107
    %v140 = vunpack.c.l.b16 %v108
    %v141 = vunpack.c.l.b16 %v109
    %v142 = vunpack.c.l.b16 %v110
    %v143 = vunpack.c.l.b16 %v111
    %v144 = vunpack.c.l.b16 %v112
    %v145 = vunpack.c.l.b16 %v113
    %v146 = vunpack.c.l.b16 %v114
    %v147 = vunpack.c.l.b16 %v115
    %v148 = vunpack.c.l.b16 %v116
    %v149 = vunpack.c.l.b16 %v117
    %v150 = vunpack.c.l.b16 %v118
    %v151 = vunpack.c.l.b16 %v119
    %v152 = vunpack.c.l.b16 %v120
    %v153 = vunpack.c.l.b16 %v121
    %v154 = vunpack.c.l.b16 %v122
    %v155 = vpack.c.b16 %v140, %v139
    %v156 = vpack.c.b16 %v142, %v141
    %v157 = vpack.c.b16 %v144, %v143
    %v158 = vpack.c.b16 %v146, %v145
    %v159 = vpack.c.b16 %v148, %v147
    %v160 = vpack.c.b16 %v150, %v149
    %v161 = vpack.c.b16 %v152, %v151
    %v162 = vpack.c.b16 %v154, %v153
    %171 = vmatpush.bf16.msra.mxu0 %v162
    %172 = vmatpush.bf16.msra.mxu0 %v161
    %173 = vmatpush.bf16.msra.mxu0 %v160
    %174 = vmatpush.bf16.msra.mxu0 %v159
    %175 = vmatpush.bf16.msra.mxu0 %v158
    %176 = vmatpush.bf16.msra.mxu0 %v157
    %177 = vmatpush.bf16.msra.mxu0 %v156
    %178 = vmatpush.bf16.msra.mxu0 %v155
    %179 = vmatmul.bf16.gmra.mxu0 %v106
    %v180 = vpop.f32.mrf.mxu0
    %v181 = vadd.f32 0.0, %v180
    %v182 = vpop.f32.mrf.mxu0
    %v183 = vadd.f32 0.0, %v182
    %184 = vdwg.mxu0
    %v185 = vpack.c.bf16 %v181, %v181
    %v186 = vpack.c.bf16 %v183, %v183
    %v187 = vld [vmem:[%s4] sm:$0x1]
    %v189 = vpack.i.b16 %v187, %v187
    %v191 = vperm.slane %v189, 0
    %v192 = vunpack.c.l.bf16 %v185
    %v193 = vunpack.c.l.bf16 %v186
    %v194 = vunpack.c.l.bf16 %v191
    %v195 = vadd.f32 %v192, %v194
    %v196 = vadd.f32 %v193, %v194
    %v197 = vpack.c.bf16 %v195, %v195
    %v198 = vpack.c.bf16 %v196, %v196
    %v199 = vunpack.c.l.bf16 %v197
    %v200 = vunpack.c.l.bf16 %v198
    %v201 = vmax.f32 %v199, 0.0
    %v202 = vmax.f32 %v200, 0.0
    %v203 = vpack.c.bf16 %v202, %v201
    %v204 = vld [vmem:[%s5] sm:$0xf]
    %v205 = vld [vmem:[%s5 + $0x4] sm:$0xf]
    %v206 = vld [vmem:[%s5 + $0x8] sm:$0xf]
    %v207 = vld [vmem:[%s5 + $0xc] sm:$0xf]
    %v208 = vld [vmem:[%s5 + $0x10] sm:$0xf]
    %v209 = vld [vmem:[%s5 + $0x14] sm:$0xf]
    %v210 = vld [vmem:[%s5 + $0x18] sm:$0xf]
    %v211 = vld [vmem:[%s5 + $0x1c] sm:$0xf]
    %v212 = vld [vmem:[%s5 + $0x20] sm:$0xf]
    %v213 = vld [vmem:[%s5 + $0x24] sm:$0xf]
    %v214 = vld [vmem:[%s5 + $0x28] sm:$0xf]
    %v215 = vld [vmem:[%s5 + $0x2c] sm:$0xf]
    %v216 = vld [vmem:[%s5 + $0x30] sm:$0xf]
    %v217 = vld [vmem:[%s5 + $0x34] sm:$0xf]
    %v218 = vld [vmem:[%s5 + $0x38] sm:$0xf]
    %v219 = vld [vmem:[%s5 + $0x3c] sm:$0xf]
    %v220 = vld [vmem:[%s6] sm:$0x1]
    %v222 = vperm.slane %v220, 0
    %v240 = vunpack.c.l.b16 %v204
    %v241 = vunpack.c.l.b16 %v205
    %v242 = vunpack.c.l.b16 %v206
    %v243 = vunpack.c.l.b16 %v207
    %v244 = vunpack.c.l.b16 %v208
    %v245 = vunpack.c.l.b16 %v209
    %v246 = vunpack.c.l.b16 %v210
    %v247 = vunpack.c.l.b16 %v211
    %v248 = vunpack.c.l.b16 %v212
    %v249 = vunpack.c.l.b16 %v213
    %v250 = vunpack.c.l.b16 %v214
    %v251 = vunpack.c.l.b16 %v215
    %v252 = vunpack.c.l.b16 %v216
    %v253 = vunpack.c.l.b16 %v217
    %v254 = vunpack.c.l.b16 %v218
    %v255 = vunpack.c.l.b16 %v219
    %v256 = vpack.c.b16 %v241, %v240
    %v257 = vpack.c.b16 %v243, %v242
    %v258 = vpack.c.b16 %v245, %v244
    %v259 = vpack.c.b16 %v247, %v246
    %v260 = vpack.c.b16 %v249, %v248
    %v261 = vpack.c.b16 %v251, %v250
    %v262 = vpack.c.b16 %v253, %v252
    %v263 = vpack.c.b16 %v255, %v254
    %272 = vmatpush.bf16.msra.mxu0 %v263
    %273 = vmatpush.bf16.msra.mxu0 %v262
    %274 = vmatpush.bf16.msra.mxu0 %v261
    %275 = vmatpush.bf16.msra.mxu0 %v260
    %276 = vmatpush.bf16.msra.mxu0 %v259
    %277 = vmatpush.bf16.msra.mxu0 %v258
    %278 = vmatpush.bf16.msra.mxu0 %v257
    %279 = vmatpush.bf16.msra.mxu0 %v256
    %280 = vmatmul.bf16.gmra.mxu0 %v203
    %v281 = vpop.f32.mrf.mxu0
    %v282 = vadd.f32 %v222, %v281
    %v283 = vpop.f32.mrf.mxu0
    %v284 = vadd.f32 %v222, %v283
    %285 = vdwg.mxu0
    %vm286 = vcmask 64512
    %287 = vst.msk [vmem:[%s7] sm:$0xff] %vm286, %v282
    %288 = vst.msk [vmem:[%s7 + $0x8] sm:$0xff] %vm286, %v284
    // Predicated region
    $region38: #{tpu_custom_call.1} parent=1 // pred_check
      _
    $region39: #{tpu_custom_call.1} parent=1 // pred_check_branch
      %290 = sbr.rel (0) target = $region41
    $region40: #{tpu_custom_call.1} parent=1 // pred_region
      _
    $region41: #{tpu_custom_call.1} parent=1 // pred_fallthru
      _
    // Predicated region
    $region42: #{tpu_custom_call.1} parent=1 // pred_check
      _
    $region43: #{tpu_custom_call.1} parent=1 // pred_check_branch
      %292 = sbr.rel (0) target = $region45
    $region44: #{tpu_custom_call.1} parent=1 // pred_region
      _
    $region45: #{tpu_custom_call.1} parent=1 // pred_fallthru
      _
    %293 = vsyncpa [#allocation3], 1
    %294 = vsyncpa [#allocation5], 1

</llo_original>
